<compile_context>
chip_gen: v7x
topology: tpu7x:2x2x1
jax: 0.10.0
libtpu: 0.0.40
codegen_flags: <defaults>
</compile_context>

<pallas_src>
import functools

import jax
import jax.numpy as jnp
from jax import lax
from jax.experimental import pallas as pl
from jax.experimental.pallas import tpu as pltpu


_NEG = -1e30  # pad value for padded class-row logits -> exp underflows to 0


def _round_up(x, m):
    return (x + m - 1) // m * m


def _cdiv(a, b):
    return -(-a // b)


def _tgl_kernel(cls_ref, prg_ref, g_ref, s_ref, carry_ref, *,
                chunk, n_chunks, t_tile, t_valid, mask_time):
    """Per-(batch element, time tile) body.

    cls_ref / prg_ref : (K_pad, t_tile)  input tiles (any float dtype)
    g_ref             : (K_pad, K_pad)   accumulator G[k,K] = sum_t comp[k,t]*prob[K,t]
    s_ref             : (K_pad, 1)       accumulator S[K]   = sum_t prob[K,t]
    carry_ref         : (K_pad, 1)       running cummax carried across time tiles
    """
    t = pl.program_id(1)

    @pl.when(t == 0)
    def _init():
        g_ref[...] = jnp.zeros_like(g_ref)
        s_ref[...] = jnp.zeros_like(s_ref)
        carry_ref[...] = jnp.zeros_like(carry_ref)

    k_pad = cls_ref.shape[0]
    lane = lax.broadcasted_iota(jnp.int32, (k_pad, chunk), 1)   # hoisted

    def chunk_body(c, state):
        g, s, carry = state
        start = pl.multiple_of(c * chunk, chunk)

        x = cls_ref[:, pl.ds(start, chunk)].astype(jnp.float32)
        p = jnp.clip(prg_ref[:, pl.ds(start, chunk)].astype(jnp.float32),
                     0.0, 1.0)

        # softmax over the class (sublane) axis.  Padded class rows hold _NEG
        # logits -> exp underflows to exactly 0, so they neither pollute the
        # denominator nor the accumulators.
        m = jnp.max(x, axis=0, keepdims=True)
        e = jnp.exp(x - m)
        prob = e / jnp.sum(e, axis=0, keepdims=True)

        if mask_time:  # static flag: only traced when T was padded
            gidx = lane + (t * t_tile + start)
            prob = jnp.where(gidx < t_valid, prob, 0.0)

        # within-chunk cummax: log2(chunk) shift-and-max doubling scan.
        # values are pre-clipped to [0, 1], so 0 is a safe neutral for the
        # lanes that wrap around in the circular roll.
        comp = p
        sft = 1
        while sft < chunk:
            rolled = pltpu.roll(comp, shift=sft, axis=1)
            comp = jnp.maximum(comp, jnp.where(lane >= sft, rolled, 0.0))
            sft *= 2
        comp = jnp.maximum(comp, carry)              # fold cross-chunk carry
        carry = jnp.max(comp, axis=1, keepdims=True)

        # one MXU contraction over time per chunk; S via a cheap lane reduce.
        g = g + lax.dot_general(comp, prob, (((1,), (1,)), ((), ())),
                                preferred_element_type=jnp.float32)
        s = s + jnp.sum(prob, axis=1, keepdims=True)
        return g, s, carry

    g, s, carry = lax.fori_loop(0, n_chunks, chunk_body,
                                (g_ref[...], s_ref[...], carry_ref[...]))
    g_ref[...] = g
    s_ref[...] = s
    carry_ref[...] = carry


def task_graph_loss(cls, prg, matrix_pre, matrix_suc, *,
                    scan_chunk=512, tile_bytes=4 * 1024 * 1024):
    """Scalar ProTAS graph loss.  cls/prg: (B, K, T) float; matrices: (K, K)."""
    B, K, T = cls.shape
    itemsize = jnp.dtype(cls.dtype).itemsize

    # ---- generation-safe tiling --------------------------------------------
    # chunk: scan granularity (multiple of 128); t_tile: DMA granularity,
    # sized so 2 inputs x 2 buffers x K_pad x t_tile x itemsize stays within a
    # fixed budget (default 16 MiB total) -> safe on v5e/v6e and v7x (64 MiB).
    K_pad = _round_up(K, 8)
    chunk = max(128, min(_round_up(scan_chunk, 128), _round_up(T, 128)))
    chunk_bytes = K_pad * chunk * itemsize
    budget_chunks = max(1, tile_bytes // chunk_bytes)
    total_chunks = _cdiv(T, chunk)
    n_chunks = int(min(budget_chunks, total_chunks))
    t_tile = n_chunks * chunk
    n_t = _cdiv(T, t_tile)
    T_pad = n_t * t_tile

    # ---- pad class rows (very negative logits) and time columns ------------
    if K_pad > K:
        cls = jnp.pad(cls, ((0, 0), (0, K_pad - K), (0, 0)),
                      constant_values=_NEG)
        prg = jnp.pad(prg, ((0, 0), (0, K_pad - K), (0, 0)),
                      constant_values=0.0)
    if T_pad > T:
        cls = jnp.pad(cls, ((0, 0), (0, 0), (0, T_pad - T)),
                      constant_values=0.0)
        prg = jnp.pad(prg, ((0, 0), (0, 0), (0, T_pad - T)),
                      constant_values=0.0)

    kernel = functools.partial(
        _tgl_kernel, chunk=chunk, n_chunks=n_chunks, t_tile=t_tile,
        t_valid=T, mask_time=(T_pad > T))

    g, s = pl.pallas_call(
        kernel,
        out_shape=(jax.ShapeDtypeStruct((B, K_pad, K_pad), jnp.float32),
                   jax.ShapeDtypeStruct((B, K_pad, 1), jnp.float32)),
        grid=(B, n_t),
        in_specs=[
            pl.BlockSpec((None, K_pad, t_tile), lambda b, t: (b, 0, t)),
            pl.BlockSpec((None, K_pad, t_tile), lambda b, t: (b, 0, t)),
        ],
        out_specs=(
            pl.BlockSpec((None, K_pad, K_pad), lambda b, t: (b, 0, 0)),
            pl.BlockSpec((None, K_pad, 1), lambda b, t: (b, 0, 0)),
        ),
        scratch_shapes=[pltpu.VMEM((K_pad, 1), jnp.float32)],  # cummax carry
        compiler_params=pltpu.CompilerParams(
            dimension_semantics=("parallel", "arbitrary"),
            vmem_limit_bytes=32 * 1024 * 1024,
        ),
    )(cls, prg)

    # Tiny (K x K) finalize in plain JAX, on the un-padded slices:
    #   loss * B*K*T = sum_{b,K} colsum(Mpre)[K]*S + sum_{b,k,K} (Msuc-Mpre)*G
    g = g[:, :K, :K]
    s = s[:, :K, 0]
    csum_pre = jnp.sum(matrix_pre, axis=0)          # (K,)
    dmat = matrix_suc - matrix_pre                  # (K, K)
    total = jnp.sum(s * csum_pre[None, :]) + jnp.sum(g * dmat[None, :, :])
    return total / (B * K * T)


def task_graph_loss_reference(cls, prg, matrix_pre, matrix_suc):
    """Pure-JAX reference mirroring the PyTorch forward exactly."""
    prob = jax.nn.softmax(cls, axis=1)
    prg = jnp.clip(prg, 0.0, 1.0)
    completion = lax.cummax(prg, axis=prg.ndim - 1)
    alpha_pre = jnp.einsum('bkt,kK->bKt', 1.0 - completion, matrix_pre)
    alpha_suc = jnp.einsum('bkt,kK->bKt', completion, matrix_suc)
    return jnp.mean((alpha_pre + alpha_suc) * prob)


if __name__ == "__main__":
    key = jax.random.PRNGKey(0)
    k_cls, k_prg, k_pre, k_suc = jax.random.split(key, 4)

    # Config 1: deliberately awkward small shapes — K not a multiple of 8 and
    # T not a multiple of the tile -> exercises class-row padding, time-column
    # masking, multiple scan chunks per tile and the cross-tile cummax carry.
    B, K, T = 2, 10, 1900
    cls = jax.random.normal(k_cls, (B, K, T), dtype=jnp.float32)
    prg = jax.random.uniform(k_prg, (B, K, T), dtype=jnp.float32,
                             minval=-0.2, maxval=1.2)
    matrix_pre = (jax.random.uniform(k_pre, (K, K)) > 0.6).astype(jnp.float32)
    matrix_suc = (jax.random.uniform(k_suc, (K, K)) > 0.6).astype(jnp.float32)

    # tiny tile budget so the test covers >1 chunk per tile and >1 time tile
    # per batch element (production default is tile_bytes=4 MiB).
    loss = task_graph_loss(cls, prg, matrix_pre, matrix_suc,
                           scan_chunk=256, tile_bytes=32 * 1024)
    loss = float(jax.block_until_ready(loss))
    ref = float(jax.block_until_ready(
        task_graph_loss_reference(cls, prg, matrix_pre, matrix_suc)))
    assert abs(loss - ref) <= 1e-4 * abs(ref) + 1e-6, (loss, ref)

    # Config 2: aligned shapes (no padding / masking path), multi-tile.
    B2, K2, T2 = 2, 8, 2048
    cls2 = jax.random.normal(k_cls, (B2, K2, T2), dtype=jnp.float32)
    prg2 = jax.random.uniform(k_prg, (B2, K2, T2), dtype=jnp.float32,
                              minval=-0.2, maxval=1.2)
    mp2 = (jax.random.uniform(k_pre, (K2, K2)) > 0.6).astype(jnp.float32)
    ms2 = (jax.random.uniform(k_suc, (K2, K2)) > 0.6).astype(jnp.float32)
    loss2 = task_graph_loss(cls2, prg2, mp2, ms2,
                            scan_chunk=512, tile_bytes=32 * 1024)
    loss2 = float(jax.block_until_ready(loss2))
    ref2 = float(jax.block_until_ready(
        task_graph_loss_reference(cls2, prg2, mp2, ms2)))
    assert abs(loss2 - ref2) <= 1e-4 * abs(ref2) + 1e-6, (loss2, ref2)

    print("KERNEL_OK")
</pallas_src>

<mosaic_0001>
module attributes {stable_mosaic.version = 11 : i64} {
  func.func @_tgl_kernel(%arg0: i32, %arg1: i32, %arg2: memref<1x16x512xf32, #tpu.memory_space<vmem>>, %arg3: memref<1x16x512xf32, #tpu.memory_space<vmem>>, %arg4: memref<1x16x16xf32, #tpu.memory_space<vmem>>, %arg5: memref<1x16x1xf32, #tpu.memory_space<vmem>>, %arg6: memref<16x1xf32, #tpu.memory_space<vmem>>) attributes {dimension_semantics = [#tpu.dimension_semantics<parallel>, #tpu.dimension_semantics<arbitrary>], iteration_bounds = array<i64: 2, 4>, scalar_prefetch = 0 : i64, scratch_operands = 1 : i64, tpu.core_type = #tpu.core_type<tc>, window_params = [{transform_indices = @transform_0, window_bounds = array<i64: 1, 16, 512>}, {transform_indices = @transform_1, window_bounds = array<i64: 1, 16, 512>}, {transform_indices = @transform_2, window_bounds = array<i64: 1, 16, 16>}, {transform_indices = @transform_3, window_bounds = array<i64: 1, 16, 1>}]} {
    %c0_i32 = arith.constant 0 : i32
    %0 = arith.cmpi eq, %arg1, %c0_i32 : i32
    %1 = arith.extui %0 : i1 to i32
    %c0_i32_0 = arith.constant 0 : i32
    %2 = arith.cmpi ne, %1, %c0_i32_0 : i32
    scf.if %2 {
      %cst = arith.constant 0.000000e+00 : f32
      %18 = vector.broadcast %cst : f32 to vector<16x16xf32>
      %c0_18 = arith.constant 0 : index
      %c0_19 = arith.constant 0 : index
      %c0_20 = arith.constant 0 : index
      %19 = vector.load %arg4[%c0_18, %c0_19, %c0_20] : memref<1x16x16xf32, #tpu.memory_space<vmem>>, vector<1x16x16xf32>
      %20 = vector.shape_cast %19 : vector<1x16x16xf32> to vector<16x16xf32>
      %21 = vector.shape_cast %18 : vector<16x16xf32> to vector<1x16x16xf32>
      tpu.vector_store %arg4[%c0_18, %c0_19, %c0_20], %21 {strides = array<i32>} : memref<1x16x16xf32, #tpu.memory_space<vmem>>, vector<1x16x16xf32>,
      %cst_21 = arith.constant 0.000000e+00 : f32
      %22 = vector.broadcast %cst_21 : f32 to vector<16x1xf32>
      %c0_22 = arith.constant 0 : index
      %c0_23 = arith.constant 0 : index
      %c0_24 = arith.constant 0 : index
      %23 = vector.load %arg5[%c0_22, %c0_23, %c0_24] : memref<1x16x1xf32, #tpu.memory_space<vmem>>, vector<1x16x1xf32>
      %24 = vector.shape_cast %23 : vector<1x16x1xf32> to vector<16x1xf32>
      %25 = vector.shape_cast %22 : vector<16x1xf32> to vector<1x16x1xf32>
      tpu.vector_store %arg5[%c0_22, %c0_23, %c0_24], %25 {strides = array<i32>} : memref<1x16x1xf32, #tpu.memory_space<vmem>>, vector<1x16x1xf32>,
      %cst_25 = arith.constant 0.000000e+00 : f32
      %26 = vector.broadcast %cst_25 : f32 to vector<16x1xf32>
      %c0_26 = arith.constant 0 : index
      %c0_27 = arith.constant 0 : index
      %27 = vector.load %arg6[%c0_26, %c0_27] : memref<16x1xf32, #tpu.memory_space<vmem>>, vector<16x1xf32>
      tpu.vector_store %arg6[%c0_26, %c0_27], %26 {strides = array<i32>} : memref<16x1xf32, #tpu.memory_space<vmem>>, vector<16x1xf32>,
    } else {
    }
    %3 = tpu.iota {dimensions = array<i32: 1>} : vector<16x256xi32>
    %c0 = arith.constant 0 : index
    %c0_1 = arith.constant 0 : index
    %c0_2 = arith.constant 0 : index
    %4 = vector.load %arg4[%c0, %c0_1, %c0_2] : memref<1x16x16xf32, #tpu.memory_space<vmem>>, vector<1x16x16xf32>
    %5 = vector.shape_cast %4 : vector<1x16x16xf32> to vector<16x16xf32>
    %c0_3 = arith.constant 0 : index
    %c0_4 = arith.constant 0 : index
    %c0_5 = arith.constant 0 : index
    %6 = vector.load %arg5[%c0_3, %c0_4, %c0_5] : memref<1x16x1xf32, #tpu.memory_space<vmem>>, vector<1x16x1xf32>
    %7 = vector.shape_cast %6 : vector<1x16x1xf32> to vector<16x1xf32>
    %c0_6 = arith.constant 0 : index
    %c0_7 = arith.constant 0 : index
    %8 = vector.load %arg6[%c0_6, %c0_7] : memref<16x1xf32, #tpu.memory_space<vmem>>, vector<16x1xf32>
    %c0_i32_8 = arith.constant 0 : i32
    %c2_i32 = arith.constant 2 : i32
    %9 = arith.addi %c0_i32_8, %c2_i32 : i32
    %c1_i32 = arith.constant 1 : i32
    %10:3 = scf.for %arg7 = %c0_i32_8 to %9 step %c1_i32 iter_args(%arg8 = %5, %arg9 = %7, %arg10 = %8) -> (vector<16x16xf32>, vector<16x1xf32>, vector<16x1xf32>)  : i32 {
      %c256_i32 = arith.constant 256 : i32
      %18 = arith.muli %arg7, %c256_i32 : i32
      %19 = tpu.assume_multiple %18, 256 : i32
      %c0_18 = arith.constant 0 : index
      %c0_19 = arith.constant 0 : index
      %20 = arith.index_cast %19 : i32 to index
      %21 = vector.load %arg2[%c0_18, %c0_19, %20] : memref<1x16x512xf32, #tpu.memory_space<vmem>>, vector<1x16x256xf32>
      %22 = vector.shape_cast %21 : vector<1x16x256xf32> to vector<16x256xf32>
      %c0_20 = arith.constant 0 : index
      %c0_21 = arith.constant 0 : index
      %23 = arith.index_cast %19 : i32 to index
      %24 = vector.load %arg3[%c0_20, %c0_21, %23] : memref<1x16x512xf32, #tpu.memory_space<vmem>>, vector<1x16x256xf32>
      %25 = vector.shape_cast %24 : vector<1x16x256xf32> to vector<16x256xf32>
      %cst = arith.constant 0.000000e+00 : f32
      %cst_22 = arith.constant 1.000000e+00 : f32
      %26 = vector.broadcast %cst : f32 to vector<16x256xf32>
      %27 = arith.maximumf %26, %25 : vector<16x256xf32>
      %28 = vector.broadcast %cst_22 : f32 to vector<16x256xf32>
      %29 = arith.minimumf %28, %27 : vector<16x256xf32>
      %cst_23 = arith.constant dense<0xFF800000> : vector<256xf32>
      %30 = vector.multi_reduction <maximumf>, %22, %cst_23 [0] : vector<16x256xf32> to vector<256xf32>
      %31 = vector.shape_cast %30 : vector<256xf32> to vector<1x256xf32>
      %32 = vector.broadcast %31 : vector<1x256xf32> to vector<16x256xf32>
      %33 = arith.subf %22, %32 : vector<16x256xf32>
      %34 = math.exp %33 : vector<16x256xf32>
      %cst_24 = arith.constant dense<0.000000e+00> : vector<256xf32>
      %35 = vector.multi_reduction <add>, %34, %cst_24 [0] : vector<16x256xf32> to vector<256xf32>
      %36 = vector.shape_cast %35 : vector<256xf32> to vector<1x256xf32>
      %37 = vector.broadcast %36 : vector<1x256xf32> to vector<16x256xf32>
      %38 = arith.divf %34, %37 : vector<16x256xf32>
      %c512_i32 = arith.constant 512 : i32
      %39 = arith.muli %arg1, %c512_i32 : i32
      %40 = arith.addi %39, %19 : i32
      %41 = vector.broadcast %40 : i32 to vector<16x256xi32>
      %42 = arith.addi %3, %41 : vector<16x256xi32>
      %c1900_i32 = arith.constant 1900 : i32
      %43 = vector.broadcast %c1900_i32 : i32 to vector<16x256xi32>
      %44 = arith.cmpi slt, %42, %43 : vector<16x256xi32>
      %cst_25 = arith.constant 0.000000e+00 : f32
      %45 = vector.broadcast %cst_25 : f32 to vector<16x256xf32>
      %46 = arith.select %44, %38, %45 : vector<16x256xi1>, vector<16x256xf32>
      %c1_i32_26 = arith.constant 1 : i32
      %47 = tpu.dynamic_rotate %29 by %c1_i32_26 dim 1 : vector<16x256xf32>, i32 -> vector<16x256xf32>
      %c1_i32_27 = arith.constant 1 : i32
      %48 = vector.broadcast %c1_i32_27 : i32 to vector<16x256xi32>
      %49 = arith.cmpi sge, %3, %48 : vector<16x256xi32>
      %cst_28 = arith.constant 0.000000e+00 : f32
      %50 = vector.broadcast %cst_28 : f32 to vector<16x256xf32>
      %51 = arith.select %49, %47, %50 : vector<16x256xi1>, vector<16x256xf32>
      %52 = arith.maximumf %29, %51 : vector<16x256xf32>
      %c2_i32_29 = arith.constant 2 : i32
      %53 = tpu.dynamic_rotate %52 by %c2_i32_29 dim 1 : vector<16x256xf32>, i32 -> vector<16x256xf32>
      %c2_i32_30 = arith.constant 2 : i32
      %54 = vector.broadcast %c2_i32_30 : i32 to vector<16x256xi32>
      %55 = arith.cmpi sge, %3, %54 : vector<16x256xi32>
      %cst_31 = arith.constant 0.000000e+00 : f32
      %56 = vector.broadcast %cst_31 : f32 to vector<16x256xf32>
      %57 = arith.select %55, %53, %56 : vector<16x256xi1>, vector<16x256xf32>
      %58 = arith.maximumf %52, %57 : vector<16x256xf32>
      %c4_i32 = arith.constant 4 : i32
      %59 = tpu.dynamic_rotate %58 by %c4_i32 dim 1 : vector<16x256xf32>, i32 -> vector<16x256xf32>
      %c4_i32_32 = arith.constant 4 : i32
      %60 = vector.broadcast %c4_i32_32 : i32 to vector<16x256xi32>
      %61 = arith.cmpi sge, %3, %60 : vector<16x256xi32>
      %cst_33 = arith.constant 0.000000e+00 : f32
      %62 = vector.broadcast %cst_33 : f32 to vector<16x256xf32>
      %63 = arith.select %61, %59, %62 : vector<16x256xi1>, vector<16x256xf32>
      %64 = arith.maximumf %58, %63 : vector<16x256xf32>
      %c8_i32 = arith.constant 8 : i32
      %65 = tpu.dynamic_rotate %64 by %c8_i32 dim 1 : vector<16x256xf32>, i32 -> vector<16x256xf32>
      %c8_i32_34 = arith.constant 8 : i32
      %66 = vector.broadcast %c8_i32_34 : i32 to vector<16x256xi32>
      %67 = arith.cmpi sge, %3, %66 : vector<16x256xi32>
      %cst_35 = arith.constant 0.000000e+00 : f32
      %68 = vector.broadcast %cst_35 : f32 to vector<16x256xf32>
      %69 = arith.select %67, %65, %68 : vector<16x256xi1>, vector<16x256xf32>
      %70 = arith.maximumf %64, %69 : vector<16x256xf32>
      %c16_i32 = arith.constant 16 : i32
      %71 = tpu.dynamic_rotate %70 by %c16_i32 dim 1 : vector<16x256xf32>, i32 -> vector<16x256xf32>
      %c16_i32_36 = arith.constant 16 : i32
      %72 = vector.broadcast %c16_i32_36 : i32 to vector<16x256xi32>
      %73 = arith.cmpi sge, %3, %72 : vector<16x256xi32>
      %cst_37 = arith.constant 0.000000e+00 : f32
      %74 = vector.broadcast %cst_37 : f32 to vector<16x256xf32>
      %75 = arith.select %73, %71, %74 : vector<16x256xi1>, vector<16x256xf32>
      %76 = arith.maximumf %70, %75 : vector<16x256xf32>
      %c32_i32 = arith.constant 32 : i32
      %77 = tpu.dynamic_rotate %76 by %c32_i32 dim 1 : vector<16x256xf32>, i32 -> vector<16x256xf32>
      %c32_i32_38 = arith.constant 32 : i32
      %78 = vector.broadcast %c32_i32_38 : i32 to vector<16x256xi32>
      %79 = arith.cmpi sge, %3, %78 : vector<16x256xi32>
      %cst_39 = arith.constant 0.000000e+00 : f32
      %80 = vector.broadcast %cst_39 : f32 to vector<16x256xf32>
      %81 = arith.select %79, %77, %80 : vector<16x256xi1>, vector<16x256xf32>
      %82 = arith.maximumf %76, %81 : vector<16x256xf32>
      %c64_i32 = arith.constant 64 : i32
      %83 = tpu.dynamic_rotate %82 by %c64_i32 dim 1 : vector<16x256xf32>, i32 -> vector<16x256xf32>
      %c64_i32_40 = arith.constant 64 : i32
      %84 = vector.broadcast %c64_i32_40 : i32 to vector<16x256xi32>
      %85 = arith.cmpi sge, %3, %84 : vector<16x256xi32>
      %cst_41 = arith.constant 0.000000e+00 : f32
      %86 = vector.broadcast %cst_41 : f32 to vector<16x256xf32>
      %87 = arith.select %85, %83, %86 : vector<16x256xi1>, vector<16x256xf32>
      %88 = arith.maximumf %82, %87 : vector<16x256xf32>
      %c128_i32 = arith.constant 128 : i32
      %89 = tpu.dynamic_rotate %88 by %c128_i32 dim 1 : vector<16x256xf32>, i32 -> vector<16x256xf32>
      %c128_i32_42 = arith.constant 128 : i32
      %90 = vector.broadcast %c128_i32_42 : i32 to vector<16x256xi32>
      %91 = arith.cmpi sge, %3, %90 : vector<16x256xi32>
      %cst_43 = arith.constant 0.000000e+00 : f32
      %92 = vector.broadcast %cst_43 : f32 to vector<16x256xf32>
      %93 = arith.select %91, %89, %92 : vector<16x256xi1>, vector<16x256xf32>
      %94 = arith.maximumf %88, %93 : vector<16x256xf32>
      %95 = vector.broadcast %arg10 : vector<16x1xf32> to vector<16x256xf32>
      %96 = arith.maximumf %94, %95 : vector<16x256xf32>
      %cst_44 = arith.constant dense<0xFF800000> : vector<16xf32>
      %97 = vector.multi_reduction <maximumf>, %96, %cst_44 [1] : vector<16x256xf32> to vector<16xf32>
      %98 = vector.shape_cast %97 : vector<16xf32> to vector<16x1xf32>
      %cst_45 = arith.constant dense<0.000000e+00> : vector<16x16xf32>
      %99 = tpu.matmul %96, %46, %cst_45 {dimension_numbers = #tpu.dot_dimension_numbers<[1], [1], [0], [0], [0, 0, 1, 0], [], []>} : vector<16x256xf32>, vector<16x256xf32>, vector<16x16xf32> -> vector<16x16xf32>
      %100 = arith.addf %arg8, %99 : vector<16x16xf32>
      %cst_46 = arith.constant dense<0.000000e+00> : vector<16xf32>
      %101 = vector.multi_reduction <add>, %46, %cst_46 [1] : vector<16x256xf32> to vector<16xf32>
      %102 = vector.shape_cast %101 : vector<16xf32> to vector<16x1xf32>
      %103 = arith.addf %arg9, %102 : vector<16x1xf32>
      scf.yield %100, %103, %98 : vector<16x16xf32>, vector<16x1xf32>, vector<16x1xf32>
    }
    %c2_i32_9 = arith.constant 2 : i32
    %c0_10 = arith.constant 0 : index
    %c0_11 = arith.constant 0 : index
    %c0_12 = arith.constant 0 : index
    %11 = vector.load %arg4[%c0_10, %c0_11, %c0_12] : memref<1x16x16xf32, #tpu.memory_space<vmem>>, vector<1x16x16xf32>
    %12 = vector.shape_cast %11 : vector<1x16x16xf32> to vector<16x16xf32>
    %13 = vector.shape_cast %10#0 : vector<16x16xf32> to vector<1x16x16xf32>
    tpu.vector_store %arg4[%c0_10, %c0_11, %c0_12], %13 {strides = array<i32>} : memref<1x16x16xf32, #tpu.memory_space<vmem>>, vector<1x16x16xf32>,
    %c0_13 = arith.constant 0 : index
    %c0_14 = arith.constant 0 : index
    %c0_15 = arith.constant 0 : index
    %14 = vector.load %arg5[%c0_13, %c0_14, %c0_15] : memref<1x16x1xf32, #tpu.memory_space<vmem>>, vector<1x16x1xf32>
    %15 = vector.shape_cast %14 : vector<1x16x1xf32> to vector<16x1xf32>
    %16 = vector.shape_cast %10#1 : vector<16x1xf32> to vector<1x16x1xf32>
    tpu.vector_store %arg5[%c0_13, %c0_14, %c0_15], %16 {strides = array<i32>} : memref<1x16x1xf32, #tpu.memory_space<vmem>>, vector<1x16x1xf32>,
    %c0_16 = arith.constant 0 : index
    %c0_17 = arith.constant 0 : index
    %17 = vector.load %arg6[%c0_16, %c0_17] : memref<16x1xf32, #tpu.memory_space<vmem>>, vector<16x1xf32>
    tpu.vector_store %arg6[%c0_16, %c0_17], %10#2 {strides = array<i32>} : memref<16x1xf32, #tpu.memory_space<vmem>>, vector<16x1xf32>,
    return
  }
  func.func @transform_0(%arg0: i32, %arg1: i32) -> (i32, i32, i32) {
    %c0_i32 = arith.constant 0 : i32
    %c0_i32_0 = arith.constant 0 : i32
    return %arg0, %c0_i32, %arg1 : i32, i32, i32
  }
  func.func @transform_1(%arg0: i32, %arg1: i32) -> (i32, i32, i32) {
    %c0_i32 = arith.constant 0 : i32
    %c0_i32_0 = arith.constant 0 : i32
    return %arg0, %c0_i32, %arg1 : i32, i32, i32
  }
  func.func @transform_2(%arg0: i32, %arg1: i32) -> (i32, i32, i32) {
    %c0_i32 = arith.constant 0 : i32
    %c0_i32_0 = arith.constant 0 : i32
    %c0_i32_1 = arith.constant 0 : i32
    return %arg0, %c0_i32, %c0_i32_0 : i32, i32, i32
  }
  func.func @transform_3(%arg0: i32, %arg1: i32) -> (i32, i32, i32) {
    %c0_i32 = arith.constant 0 : i32
    %c0_i32_0 = arith.constant 0 : i32
    %c0_i32_1 = arith.constant 0 : i32
    return %arg0, %c0_i32, %c0_i32_0 : i32, i32, i32
  }
}

</mosaic_0001>

<llo_original>
// kernel: tpu_custom_call.1
$region0: #{tpu_custom_call.1}
  #allocation0 [shape = 'u32[]', space=smem, size = 0x4, offset = 0x4, fixed_abs, tag = 'smem constant byte address 0x4 - core index']
  #allocation1 [shape = 'u32[144,128]{1,0:T(1,128)}', space=vmem, size = 0x12000, scoped, tag = 'internal scratch']
  #allocation2 [shape = 'f32[16,1]{1,0:T(8,128)}', space=vmem, size = 0x2000, scoped, tag = 'scratch operand']
  %s0 = inlined_call_operand.hbm [shape: f32[2,16,2048], index: 0, kind: input, shape index: {}]
  %s1 = inlined_call_operand.hbm [shape: f32[2,16,2048], index: 1, kind: input, shape index: {}]
  %s2 = inlined_call_operand.hbm [shape: f32[2,16,16], index: 2, kind: output, shape index: {0}]
  %s3 = inlined_call_operand.vmem [shape: f32[2,16,1], index: 3, kind: output, shape index: {1}]
  %4 = xla_tuple %s2, %s3
  %s5 = sld [smem:[#allocation0]]
  $region68: #{tpu_custom_call.1} parent=0
    _
  %s7 = ssub.s32 1, %s5
  %s8 = scalar_select 0, %s7, %s5
  $region1: #{tpu_custom_call.1} parent=0
    #allocation3 [shape = 'u8[65536]{0}', space=vmem, size = 0x10000, scoped, tag = 'input window, operand 0']
    #allocation4 [shape = 's32[2]{0}', space=sflag, size = 0x8, scoped, tag = 'scoped memory for tpu_custom_call.1']
    #allocation5 [shape = 's32[2]{0}', space=sflag, size = 0x8, scoped, tag = 'scoped memory for tpu_custom_call.1']
    #allocation6 [shape = 'u8[65536]{0}', space=vmem, size = 0x10000, scoped, tag = 'input window, operand 1']
    #allocation7 [shape = 's32[2]{0}', space=sflag, size = 0x8, scoped, tag = 'scoped memory for tpu_custom_call.1']
    #allocation8 [shape = 'u8[16384]{0}', space=vmem, size = 0x4000, scoped, tag = 'output window, operand 0']
    %9 = vsyncpa [#allocation4], 0
    %s10 = scalar_lea.sflag [#allocation4], 1
    %11 = vsyncpa %s10, 0
    %12 = vsyncpa [#allocation7], 0
    %s13 = scalar_lea.sflag [#allocation7], 1
    %14 = vsyncpa %s13, 0
    %15 = vsyncpa [#allocation5], 0
    %s16 = scalar_lea.sflag [#allocation5], 1
    %17 = vsyncpa %s16, 0
    loop: start=0, step=1, limit=10
    $region2: #{tpu_custom_call.1} parent=1 // loop_pre_header
      _
    $region3: #{tpu_custom_call.1} parent=1 // loop_header
      %s19 = sphi 0, %s23
      %p20 = scmp.ge.s32.totalorder %s19, 10
      %s26 = sphi 0, %s38
      %s27 = sphi 0, %s34
      %s28 = sphi 0, %s26
      %s29 = sphi 0, %s27
      %s30 = sphi 0, %s28
      %s31 = sphi 0, %s29
      %s43 = sphi 0, %s45
      %s46 = sphi 0, %s43
      %s47 = sphi 0, %s46
      %s63 = sphi 0, %s47
      %s71 = sphi 0, %s73
      %s74 = sphi 0, %s71
      %s75 = sphi 0, %s74
      %s91 = sphi 0, %s75
      %s97 = sphi 0, %s99
      %s100 = sphi 0, %s97
      %s101 = sphi 0, %s100
      %s117 = sphi 0, %s101
      %s123 = sphi 0, %s125
      %s126 = sphi 0, %s123
      %s127 = sphi 0, %s126
      %s143 = sphi 0, %s127
    $region4: #{tpu_custom_call.1} parent=1 // loop_header_branch
      %22 = sbr.rel (%p20) target = $region8
    $region5: #{tpu_custom_call.1} parent=1 // loop_body
      %s24 = ssub.s32 %s19, 1
      %s25 = ssub.s32 %s19, 2
      %s32 = sadd.s32 1, %s27
      %p33 = scmp.ge.s32.totalorder %s32, 4
      %s34 = scalar_select %p33, 0, %s32
      %s35 = sadd.s32 1, %s26
      %s36 = scalar_select %p33, %s35, %s26
      %p37 = scmp.ge.s32.totalorder %s36, 2
      %s38 = scalar_select %p37, 0, %s36
      %s39 = ssub.s32 %s26, %s38
      %s40 = ssub.s32 %s27, %s34
      %s41 = sor.u32 %s39, %s40
      %p42 = scmp.eq.s32.totalorder %s41, 0
      %s44 = sadd.s32 %s43, 1
      %s45 = scalar_select %p42, %s43, %s44
      %p48 = pneg %p42
      %p49 = scmp.eq.s32.totalorder %s19, 7
      %p50 = por %p48, %p49
      %p51 = scmp.ne.s32.totalorder %s43, %s46
      %p52 = scmp.eq.s32.totalorder %s19, 0
      %p53 = por %p51, %p52
      %p54 = scmp.ne.s32.totalorder %s43, %s46
      %p55 = scmp.eq.s32.totalorder %s24, 7
      %p56 = por %p54, %p55
      %p57 = scmp.ne.s32.totalorder %s46, %s47
      %p58 = scmp.eq.s32.totalorder %s24, 0
      %p59 = por %p57, %p58
      %p60 = scmp.ne.s32.totalorder %s46, %s47
      %p61 = scmp.eq.s32.totalorder %s25, 7
      %p62 = por %p60, %p61
      %p64 = scmp.ne.s32.totalorder %s47, %s63
      %p65 = scmp.eq.s32.totalorder %s25, 0
      %p66 = por %p64, %p65
      %s67 = ssub.s32 %s26, %s38
      %s68 = ssub.s32 %s27, %s34
      %s69 = sor.u32 %s67, %s68
      %p70 = scmp.eq.s32.totalorder %s69, 0
      %s72 = sadd.s32 %s71, 1
      %s73 = scalar_select %p70, %s71, %s72
      %p76 = pneg %p70
      %p77 = scmp.eq.s32.totalorder %s19, 7
      %p78 = por %p76, %p77
      %p79 = scmp.ne.s32.totalorder %s71, %s74
      %p80 = scmp.eq.s32.totalorder %s19, 0
      %p81 = por %p79, %p80
      %p82 = scmp.ne.s32.totalorder %s71, %s74
      %p83 = scmp.eq.s32.totalorder %s24, 7
      %p84 = por %p82, %p83
      %p85 = scmp.ne.s32.totalorder %s74, %s75
      %p86 = scmp.eq.s32.totalorder %s24, 0
      %p87 = por %p85, %p86
      %p88 = scmp.ne.s32.totalorder %s74, %s75
      %p89 = scmp.eq.s32.totalorder %s25, 7
      %p90 = por %p88, %p89
      %p92 = scmp.ne.s32.totalorder %s75, %s91
      %p93 = scmp.eq.s32.totalorder %s25, 0
      %p94 = por %p92, %p93
      %s95 = ssub.s32 %s26, %s38
      %p96 = scmp.eq.s32.totalorder %s95, 0
      %s98 = sadd.s32 %s97, 1
      %s99 = scalar_select %p96, %s97, %s98
      %p102 = pneg %p96
      %p103 = scmp.eq.s32.totalorder %s19, 7
      %p104 = por %p102, %p103
      %p105 = scmp.ne.s32.totalorder %s97, %s100
      %p106 = scmp.eq.s32.totalorder %s19, 0
      %p107 = por %p105, %p106
      %p108 = scmp.ne.s32.totalorder %s97, %s100
      %p109 = scmp.eq.s32.totalorder %s24, 7
      %p110 = por %p108, %p109
      %p111 = scmp.ne.s32.totalorder %s100, %s101
      %p112 = scmp.eq.s32.totalorder %s24, 0
      %p113 = por %p111, %p112
      %p114 = scmp.ne.s32.totalorder %s100, %s101
      %p115 = scmp.eq.s32.totalorder %s25, 7
      %p116 = por %p114, %p115
      %p118 = scmp.ne.s32.totalorder %s101, %s117
      %p119 = scmp.eq.s32.totalorder %s25, 0
      %p120 = por %p118, %p119
      %s121 = ssub.s32 %s26, %s38
      %p122 = scmp.eq.s32.totalorder %s121, 0
      %s124 = sadd.s32 %s123, 1
      %s125 = scalar_select %p122, %s123, %s124
      %p128 = pneg %p122
      %p129 = scmp.eq.s32.totalorder %s19, 7
      %p130 = por %p128, %p129
      %p131 = scmp.ne.s32.totalorder %s123, %s126
      %p132 = scmp.eq.s32.totalorder %s19, 0
      %p133 = por %p131, %p132
      %p134 = scmp.ne.s32.totalorder %s123, %s126
      %p135 = scmp.eq.s32.totalorder %s24, 7
      %p136 = por %p134, %p135
      %p137 = scmp.ne.s32.totalorder %s126, %s127
      %p138 = scmp.eq.s32.totalorder %s24, 0
      %p139 = por %p137, %p138
      %p140 = scmp.ne.s32.totalorder %s126, %s127
      %p141 = scmp.eq.s32.totalorder %s25, 7
      %p142 = por %p140, %p141
      %p144 = scmp.ne.s32.totalorder %s127, %s143
      %p145 = scmp.eq.s32.totalorder %s25, 0
      %p146 = por %p144, %p145
      %p147 = scmp.le.s32.totalorder 1, %s19
      %p148 = scmp.lt.s32.totalorder %s19, 9
      %p149 = pnand %p147, %p148
      %p150 = pneg %p149
      // Predicated region
      $region9: #{tpu_custom_call.1} parent=5 // pred_check
        _
      $region10: #{tpu_custom_call.1} parent=5 // pred_check_branch
        %152 = sbr.rel (%p149) target = $region12
      $region11: #{tpu_custom_call.1} parent=5 // pred_region
        %s153 = ssub.s32 %s19, 1
      $region12: #{tpu_custom_call.1} parent=5 // pred_fallthru
        _
      %p154 = scmp.lt.s32.totalorder %s19, 8
      // Predicated region
      $region13: #{tpu_custom_call.1} parent=5 // pred_check
        %p155 = pneg %p154
      $region14: #{tpu_custom_call.1} parent=5 // pred_check_branch
        %157 = sbr.rel (%p155) target = $region16
      $region15: #{tpu_custom_call.1} parent=5 // pred_region
        // Predicated region
        $region17: #{tpu_custom_call.1} parent=15 // pred_check
          %p158 = pneg %p53
        $region18: #{tpu_custom_call.1} parent=15 // pred_check_branch
          %160 = sbr.rel (%p158) target = $region20
        $region19: #{tpu_custom_call.1} parent=15 // pred_region
          %s161 = sand.u32 %s43, 1
          %s162 = scalar_lea.sflag [#allocation4], %s161
          %s163 = sand.u32 %s43, 1
          %s164 = smul.addr %s163, 64
          %s165 = scalar_lea.vmem [#allocation3], %s164
          %s166 = smul.u32 4, %s27
          %s168 = ssub.s32 1024, 1024
          %169 = vsyncadd %s162, %s168
          %s170 = smul.addr %s26, 32
          %s171 = sadd.s32 %s166, %s170
          %s172 = smul.addr %s171, 128
          %s173 = scalar_lea.hbm %s0, %s172
          %s174 = sshll.u32 %s165, 4
          %s175 = int_to_ptr.vmem [resolvable:$true] %s174
          %180 = dma.hbm_to_vmem [thread:$0]  %s173, 1024, %s175, %s162, 2048, 512, 32
        $region20: #{tpu_custom_call.1} parent=15 // pred_fallthru
          _
        // Predicated region
        $region21: #{tpu_custom_call.1} parent=15 // pred_check
          %p181 = pneg %p81
        $region22: #{tpu_custom_call.1} parent=15 // pred_check_branch
          %183 = sbr.rel (%p181) target = $region24
        $region23: #{tpu_custom_call.1} parent=15 // pred_region
          %s184 = sand.u32 %s71, 1
          %s185 = scalar_lea.sflag [#allocation7], %s184
          %s186 = sand.u32 %s71, 1
          %s187 = smul.addr %s186, 64
          %s188 = scalar_lea.vmem [#allocation6], %s187
          %s189 = smul.u32 4, %s27
          %s191 = ssub.s32 1024, 1024
          %192 = vsyncadd %s185, %s191
          %s193 = smul.addr %s26, 32
          %s194 = sadd.s32 %s189, %s193
          %s195 = smul.addr %s194, 128
          %s196 = scalar_lea.hbm %s1, %s195
          %s197 = sshll.u32 %s188, 4
          %s198 = int_to_ptr.vmem [resolvable:$true] %s197
          %203 = dma.hbm_to_vmem [thread:$0]  %s196, 1024, %s198, %s185, 2048, 512, 32
        $region24: #{tpu_custom_call.1} parent=15 // pred_fallthru
          _
      $region16: #{tpu_custom_call.1} parent=5 // pred_fallthru
        _
      %p204 = scmp.le.s32.totalorder 1, %s19
      %p205 = scmp.lt.s32.totalorder %s19, 9
      %p206 = pnand %p204, %p205
      %p207 = pneg %p206
      // Predicated region
      $region25: #{tpu_custom_call.1} parent=5 // pred_check
        _
      $region26: #{tpu_custom_call.1} parent=5 // pred_check_branch
        %209 = sbr.rel (%p206) target = $region28
      $region27: #{tpu_custom_call.1} parent=5 // pred_region
        %s210 = ssub.s32 %s19, 1
        %s211 = sand.u32 %s46, 1
        %s212 = scalar_lea.sflag [#allocation4], %s211
        %s213 = sand.u32 %s46, 1
        %s214 = smul.addr %s213, 64
        %s215 = scalar_lea.vmem [#allocation3], %s214
        // Predicated region
        $region29: #{tpu_custom_call.1} parent=27 // pred_check
          %p216 = pneg %p59
        $region30: #{tpu_custom_call.1} parent=27 // pred_check_branch
          %218 = sbr.rel (%p216) target = $region32
        $region31: #{tpu_custom_call.1} parent=27 // pred_region
          %219 = dma.done %s212, 1024
        $region32: #{tpu_custom_call.1} parent=27 // pred_fallthru
          _
        %s220 = sand.u32 %s74, 1
        %s221 = scalar_lea.sflag [#allocation7], %s220
        %s222 = sand.u32 %s74, 1
        %s223 = smul.addr %s222, 64
        %s224 = scalar_lea.vmem [#allocation6], %s223
        // Predicated region
        $region33: #{tpu_custom_call.1} parent=27 // pred_check
          %p225 = pneg %p87
        $region34: #{tpu_custom_call.1} parent=27 // pred_check_branch
          %227 = sbr.rel (%p225) target = $region36
        $region35: #{tpu_custom_call.1} parent=27 // pred_region
          %228 = dma.done %s221, 1024
        $region36: #{tpu_custom_call.1} parent=27 // pred_fallthru
          _
        %s229 = sand.u32 %s46, 1
        %s230 = scalar_lea.sflag [#allocation4], %s229
        %s231 = sand.u32 %s46, 1
        %s232 = smul.addr %s231, 64
        %s233 = scalar_lea.vmem [#allocation3], %s232
        %p234 = pneg %p59
        %p235 = pneg %p56
        %s236 = sand.u32 %s74, 1
        %s237 = scalar_lea.sflag [#allocation7], %s236
        %s238 = sand.u32 %s74, 1
        %s239 = smul.addr %s238, 64
        %s240 = scalar_lea.vmem [#allocation6], %s239
        %p241 = pneg %p87
        %p242 = pneg %p84
        %p243 = pneg %p113
        %p244 = pneg %p110
        %s245 = sand.u32 %s100, 1
        %s246 = scalar_lea.sflag [#allocation5], %s245
        %s247 = sand.u32 %s100, 1
        %s248 = smul.addr %s247, 16
        %s249 = scalar_lea.vmem [#allocation8], %s248
        %p250 = pneg %p139
        %p251 = pneg %p136
        %p252 = scmp.lt.s32.totalorder %s28, 1
        %s253 = scalar_select %p252, %s28, 1
        %s254 = smul.addr %s253, 2
        %s255 = smul.addr %s254, 8
        %s256 = scalar_lea.vmem %s3, %s255
        %s257 = smul.u32 4, %s29
        %s258 = smul.u32 4, %s29
        %p259 = scmp.lt.s32.totalorder %s28, 1
        %s260 = scalar_select %p259, %s28, 1
        %s261 = smul.addr %s260, 2
        %s262 = smul.addr %s261, 8
        %s263 = scalar_lea.vmem %s3, %s262
        %p264 = scmp.eq.s32.totalorder %s29, 0
        // Predicated region
        $region37: #{tpu_custom_call.1} parent=27 // pred_check
          %p265 = pneg %p264
        $region38: #{tpu_custom_call.1} parent=27 // pred_check_branch
          %267 = sbr.rel (%p265) target = $region40
        $region39: #{tpu_custom_call.1} parent=27 // pred_region
          %vm268 = vcmask 130048
          %269 = vst.msk [vmem:[%s249] sm:$0xff] %vm268, 0.0
          %270 = vst.msk [vmem:[%s249 + $0x8] sm:$0xff] %vm268, 0.0
          %vm271 = vcmask 7168
          %272 = vst.msk [vmem:[%s263] sm:$0xff] %vm271, 0.0
          %273 = vst.msk [vmem:[%s263 + $0x8] sm:$0xff] %vm271, 0.0
          %274 = vst.msk [vmem:[#allocation2] sm:$0xff] %vm271, 0.0
          %275 = vst.msk [vmem:[#allocation2 + $0x8] sm:$0xff] %vm271, 0.0
        $region40: #{tpu_custom_call.1} parent=27 // pred_fallthru
          _
        %v276 = vlaneseq
        %v277 = vand.u32 %v276, 127
        %v278 = vadd.s32 %v277, 128
        %v279 = vld [vmem:[%s249] sm:$0xff]
        %v280 = vld [vmem:[%s249 + $0x8] sm:$0xff]
        %v281 = vld [vmem:[%s263] sm:$0xff]
        %v282 = vld [vmem:[%s263 + $0x8] sm:$0xff]
        %v283 = vld [vmem:[#allocation2] sm:$0xff]
        %v284 = vld [vmem:[#allocation2 + $0x8] sm:$0xff]
        loop: start=0, step=1, limit=2
        $region41: #{tpu_custom_call.1} parent=27 // loop_pre_header
          _
        $region42: #{tpu_custom_call.1} parent=27 // loop_header
          %s286 = sphi 0, %s290
          %p287 = scmp.ge.s32.totalorder %s286, 2
          %v291 = vphi %v279, %v643
          %v292 = vphi %v280, %v644
          %v293 = vphi %v281, %v651
          %v294 = vphi %v282, %v652
          %v295 = vphi %v283, %v564
          %v296 = vphi %v284, %v567
        $region43: #{tpu_custom_call.1} parent=27 // loop_header_branch
          %289 = sbr.rel (%p287) target = $region47
        $region44: #{tpu_custom_call.1} parent=27 // loop_body
          %s297 = smul.u32 %s286, 256
          %s298 = sshra.s32 %s297, 7
          %s299 = sand.u32 %s297, 127
          %s300 = smul.addr %s298, 8
          %s301 = scalar_lea.vmem %s215, %s300 [#allocation3]
          %v302 = vld [vmem:[%s301] sm:$0xff]
          %v303 = vld [vmem:[%s301 + $0x8] sm:$0xff]
          %v304 = vld [vmem:[%s301 + $0x20] sm:$0xff]
          %v305 = vld [vmem:[%s301 + $0x28] sm:$0xff]
          %s306 = smul.addr %s298, 8
          %s307 = scalar_lea.vmem %s224, %s306 [#allocation6]
          %v308 = vld [vmem:[%s307] sm:$0xff]
          %v309 = vld [vmem:[%s307 + $0x8] sm:$0xff]
          %v310 = vld [vmem:[%s307 + $0x20] sm:$0xff]
          %v311 = vld [vmem:[%s307 + $0x28] sm:$0xff]
          %v312 = vmax.f32 %v308, 0.0
          %v313 = vmax.f32 %v309, 0.0
          %v314 = vmax.f32 %v310, 0.0
          %v315 = vmax.f32 %v311, 0.0
          %v316 = vmin.f32 %v312, 1.0
          %v317 = vmin.f32 %v313, 1.0
          %v318 = vmin.f32 %v314, 1.0
          %v319 = vmin.f32 %v315, 1.0
          %v320 = vmax.f32 %v302, %v304
          %v321 = vrot.slane %v320, 4
          %v322 = vmax.f32 %v320, %v321
          %v323 = vrot.slane %v322, 2
          %v324 = vmax.f32 %v322, %v323
          %v325 = vrot.slane %v324, 1
          %v326 = vmax.f32 %v324, %v325
          %v327 = vmax.f32 %v303, %v305
          %v328 = vrot.slane %v327, 4
          %v329 = vmax.f32 %v327, %v328
          %v330 = vrot.slane %v329, 2
          %v331 = vmax.f32 %v329, %v330
          %v332 = vrot.slane %v331, 1
          %v333 = vmax.f32 %v331, %v332
          %v334 = vsub.f32 %v302, %v326
          %v335 = vsub.f32 %v303, %v333
          %v336 = vsub.f32 %v304, %v326
          %v337 = vsub.f32 %v305, %v333
          %v338 = vmul.f32 %v334, 1.442695
          %v339 = vpow.pop %v338
          %v340 = vmul.f32 %v335, 1.442695
          %v341 = vpow.pop %v340
          %v342 = vmul.f32 %v336, 1.442695
          %v343 = vpow.pop %v342
          %v344 = vmul.f32 %v337, 1.442695
          %v345 = vpow.pop %v344
          %v346 = vadd.f32 %v339, %v343
          %v347 = vrot.slane %v346, 4
          %v348 = vadd.f32 %v346, %v347
          %v349 = vrot.slane %v348, 2
          %v350 = vadd.f32 %v348, %v349
          %v351 = vrot.slane %v350, 1
          %v352 = vadd.f32 %v350, %v351
          %v353 = vadd.f32 %v341, %v345
          %v354 = vrot.slane %v353, 4
          %v355 = vadd.f32 %v353, %v354
          %v356 = vrot.slane %v355, 2
          %v357 = vadd.f32 %v355, %v356
          %v358 = vrot.slane %v357, 1
          %v359 = vadd.f32 %v357, %v358
          %v360 = vrcp.pop %v352
          %v361 = vmul.f32 %v339, %v360
          %v362 = vrcp.pop %v359
          %v363 = vmul.f32 %v341, %v362
          %v364 = vmul.f32 %v343, %v360
          %v365 = vmul.f32 %v345, %v362
          %s366 = smul.u32 %s29, 512
          %s367 = sadd.s32 %s366, %s297
          %v368 = vstv %s367
          %v369 = vadd.s32 %v277, %v368
          %v370 = vadd.s32 %v278, %v368
          %vm371 = vcmp.lt.s32.totalorder %v369, 1900
          %vm372 = vcmp.lt.s32.totalorder %v370, 1900
          %v373 = vsel %vm371, %v361, 0.0
          %v374 = vsel %vm372, %v363, 0.0
          %v375 = vsel %vm371, %v364, 0.0
          %v376 = vsel %vm372, %v365, 0.0
          %377 = vrot.lane.b32.xlu0 %v316, 1
          %v378 = vpop.permute.xlu0 %377
          %379 = vrot.lane.b32.xlu0 %v318, 1
          %v380 = vpop.permute.xlu0 %379
          %381 = vrot.lane.b32.xlu0 %v317, 1
          %v382 = vpop.permute.xlu0 %381
          %383 = vrot.lane.b32.xlu0 %v319, 1
          %v384 = vpop.permute.xlu0 %383
          %vm385 = vcmp.lt.s32.totalorder %v277, 1
          %v386 = vsel %vm385, %v378, %v382
          %v387 = vsel %vm385, %v380, %v384
          %v388 = vsel %vm385, %v382, %v378
          %v389 = vsel %vm385, %v384, %v380
          %vm390 = vcmp.ge.s32.totalorder %v277, 1
          %vm391 = vcmp.ge.s32.totalorder %v278, 1
          %v392 = vsel %vm390, %v388, 0.0
          %v393 = vsel %vm391, %v386, 0.0
          %v394 = vsel %vm390, %v389, 0.0
          %v395 = vsel %vm391, %v387, 0.0
          %v396 = vmax.f32 %v316, %v392
          %v397 = vmax.f32 %v317, %v393
          %v398 = vmax.f32 %v318, %v394
          %v399 = vmax.f32 %v319, %v395
          %400 = vrot.lane.b32.xlu0 %v396, 2
          %v401 = vpop.permute.xlu0 %400
          %402 = vrot.lane.b32.xlu0 %v398, 2
          %v403 = vpop.permute.xlu0 %402
          %404 = vrot.lane.b32.xlu0 %v397, 2
          %v405 = vpop.permute.xlu0 %404
          %406 = vrot.lane.b32.xlu0 %v399, 2
          %v407 = vpop.permute.xlu0 %406
          %vm408 = vcmp.lt.s32.totalorder %v277, 2
          %v409 = vsel %vm408, %v401, %v405
          %v410 = vsel %vm408, %v403, %v407
          %v411 = vsel %vm408, %v405, %v401
          %v412 = vsel %vm408, %v407, %v403
          %vm413 = vcmp.ge.s32.totalorder %v277, 2
          %vm414 = vcmp.ge.s32.totalorder %v278, 2
          %v415 = vsel %vm413, %v411, 0.0
          %v416 = vsel %vm414, %v409, 0.0
          %v417 = vsel %vm413, %v412, 0.0
          %v418 = vsel %vm414, %v410, 0.0
          %v419 = vmax.f32 %v396, %v415
          %v420 = vmax.f32 %v397, %v416
          %v421 = vmax.f32 %v398, %v417
          %v422 = vmax.f32 %v399, %v418
          %423 = vrot.lane.b32.xlu0 %v419, 4
          %v424 = vpop.permute.xlu0 %423
          %425 = vrot.lane.b32.xlu0 %v421, 4
          %v426 = vpop.permute.xlu0 %425
          %427 = vrot.lane.b32.xlu0 %v420, 4
          %v428 = vpop.permute.xlu0 %427
          %429 = vrot.lane.b32.xlu0 %v422, 4
          %v430 = vpop.permute.xlu0 %429
          %vm431 = vcmp.lt.s32.totalorder %v277, 4
          %v432 = vsel %vm431, %v424, %v428
          %v433 = vsel %vm431, %v426, %v430
          %v434 = vsel %vm431, %v428, %v424
          %v435 = vsel %vm431, %v430, %v426
          %vm436 = vcmp.ge.s32.totalorder %v277, 4
          %vm437 = vcmp.ge.s32.totalorder %v278, 4
          %v438 = vsel %vm436, %v434, 0.0
          %v439 = vsel %vm437, %v432, 0.0
          %v440 = vsel %vm436, %v435, 0.0
          %v441 = vsel %vm437, %v433, 0.0
          %v442 = vmax.f32 %v419, %v438
          %v443 = vmax.f32 %v420, %v439
          %v444 = vmax.f32 %v421, %v440
          %v445 = vmax.f32 %v422, %v441
          %446 = vrot.lane.b32.xlu0 %v442, 8
          %v447 = vpop.permute.xlu0 %446
          %448 = vrot.lane.b32.xlu0 %v444, 8
          %v449 = vpop.permute.xlu0 %448
          %450 = vrot.lane.b32.xlu0 %v443, 8
          %v451 = vpop.permute.xlu0 %450
          %452 = vrot.lane.b32.xlu0 %v445, 8
          %v453 = vpop.permute.xlu0 %452
          %vm454 = vcmp.lt.s32.totalorder %v277, 8
          %v455 = vsel %vm454, %v447, %v451
          %v456 = vsel %vm454, %v449, %v453
          %v457 = vsel %vm454, %v451, %v447
          %v458 = vsel %vm454, %v453, %v449
          %vm459 = vcmp.ge.s32.totalorder %v277, 8
          %vm460 = vcmp.ge.s32.totalorder %v278, 8
          %v461 = vsel %vm459, %v457, 0.0
          %v462 = vsel %vm460, %v455, 0.0
          %v463 = vsel %vm459, %v458, 0.0
          %v464 = vsel %vm460, %v456, 0.0
          %v465 = vmax.f32 %v442, %v461
          %v466 = vmax.f32 %v443, %v462
          %v467 = vmax.f32 %v444, %v463
          %v468 = vmax.f32 %v445, %v464
          %469 = vrot.lane.b32.xlu0 %v465, 16
          %v470 = vpop.permute.xlu0 %469
          %471 = vrot.lane.b32.xlu0 %v467, 16
          %v472 = vpop.permute.xlu0 %471
          %473 = vrot.lane.b32.xlu0 %v466, 16
          %v474 = vpop.permute.xlu0 %473
          %475 = vrot.lane.b32.xlu0 %v468, 16
          %v476 = vpop.permute.xlu0 %475
          %vm477 = vcmp.lt.s32.totalorder %v277, 16
          %v478 = vsel %vm477, %v470, %v474
          %v479 = vsel %vm477, %v472, %v476
          %v480 = vsel %vm477, %v474, %v470
          %v481 = vsel %vm477, %v476, %v472
          %vm482 = vcmp.ge.s32.totalorder %v277, 16
          %vm483 = vcmp.ge.s32.totalorder %v278, 16
          %v484 = vsel %vm482, %v480, 0.0
          %v485 = vsel %vm483, %v478, 0.0
          %v486 = vsel %vm482, %v481, 0.0
          %v487 = vsel %vm483, %v479, 0.0
          %v488 = vmax.f32 %v465, %v484
          %v489 = vmax.f32 %v466, %v485
          %v490 = vmax.f32 %v467, %v486
          %v491 = vmax.f32 %v468, %v487
          %492 = vrot.lane.b32.xlu0 %v488, 32
          %v493 = vpop.permute.xlu0 %492
          %494 = vrot.lane.b32.xlu0 %v490, 32
          %v495 = vpop.permute.xlu0 %494
          %496 = vrot.lane.b32.xlu0 %v489, 32
          %v497 = vpop.permute.xlu0 %496
          %498 = vrot.lane.b32.xlu0 %v491, 32
          %v499 = vpop.permute.xlu0 %498
          %vm500 = vcmp.lt.s32.totalorder %v277, 32
          %v501 = vsel %vm500, %v493, %v497
          %v502 = vsel %vm500, %v495, %v499
          %v503 = vsel %vm500, %v497, %v493
          %v504 = vsel %vm500, %v499, %v495
          %vm505 = vcmp.ge.s32.totalorder %v277, 32
          %vm506 = vcmp.ge.s32.totalorder %v278, 32
          %v507 = vsel %vm505, %v503, 0.0
          %v508 = vsel %vm506, %v501, 0.0
          %v509 = vsel %vm505, %v504, 0.0
          %v510 = vsel %vm506, %v502, 0.0
          %v511 = vmax.f32 %v488, %v507
          %v512 = vmax.f32 %v489, %v508
          %v513 = vmax.f32 %v490, %v509
          %v514 = vmax.f32 %v491, %v510
          %515 = vrot.lane.b32.xlu0 %v511, 64
          %v516 = vpop.permute.xlu0 %515
          %517 = vrot.lane.b32.xlu0 %v513, 64
          %v518 = vpop.permute.xlu0 %517
          %519 = vrot.lane.b32.xlu0 %v512, 64
          %v520 = vpop.permute.xlu0 %519
          %521 = vrot.lane.b32.xlu0 %v514, 64
          %v522 = vpop.permute.xlu0 %521
          %vm523 = vcmp.lt.s32.totalorder %v277, 64
          %v524 = vsel %vm523, %v516, %v520
          %v525 = vsel %vm523, %v518, %v522
          %v526 = vsel %vm523, %v520, %v516
          %v527 = vsel %vm523, %v522, %v518
          %vm528 = vcmp.ge.s32.totalorder %v277, 64
          %vm529 = vcmp.ge.s32.totalorder %v278, 64
          %v530 = vsel %vm528, %v526, 0.0
          %v531 = vsel %vm529, %v524, 0.0
          %v532 = vsel %vm528, %v527, 0.0
          %v533 = vsel %vm529, %v525, 0.0
          %v534 = vmax.f32 %v511, %v530
          %v535 = vmax.f32 %v512, %v531
          %v536 = vmax.f32 %v513, %v532
          %v537 = vmax.f32 %v514, %v533
          %vm538 = vcmp.ge.s32.totalorder %v277, 128
          %vm539 = vcmp.ge.s32.totalorder %v278, 128
          %v540 = vsel %vm538, %v535, 0.0
          %v541 = vsel %vm539, %v534, 0.0
          %v542 = vsel %vm538, %v537, 0.0
          %v543 = vsel %vm539, %v536, 0.0
          %v544 = vmax.f32 %v534, %v540
          %v545 = vmax.f32 %v535, %v541
          %v546 = vmax.f32 %v536, %v542
          %v547 = vmax.f32 %v537, %v543
          %549 = vset.pattern.permute.xlu0 0
          %550 = vperm.xlu0 %549, %v295
          %v551 = vpop.permute.xlu0 %550
          %554 = vset.pattern.permute.xlu0 0
          %555 = vperm.xlu0 %554, %v296
          %v556 = vpop.permute.xlu0 %555
          %v558 = vmax.f32 %v544, %v551
          %v559 = vmax.f32 %v545, %v551
          %v560 = vmax.f32 %v546, %v556
          %v561 = vmax.f32 %v547, %v556
          %v562 = vmax.f32 %v558, %v559
          %563 = vmax.xlane.f32.xlu0 %v562
          %v564 = vpop.xlane.xlu0 %563
          %v565 = vmax.f32 %v560, %v561
          %566 = vmax.xlane.f32.xlu0 %v565
          %v567 = vpop.xlane.xlu0 %566
          %568 = vmatprep.subr.mxu0 %v374
          %569 = vmatpush1.xpose.msra.mxu0 %v373
          %570 = vmatprep.subr.mxu0 %v376
          %571 = vmatpush1.xpose.msra.mxu0 %v375
          %572 = vmatprep.subr.mxu0 0.0
          %573 = vmatpush1.xpose.msra.mxu0 0.0
          %574 = vmatprep.subr.mxu0 0.0
          %575 = vmatpush1.xpose.msra.mxu0 0.0
          %576 = vmatprep.subr.mxu0 0.0
          %577 = vmatpush1.xpose.msra.mxu0 0.0
          %578 = vmatprep.subr.mxu0 0.0
          %579 = vmatpush1.xpose.msra.mxu0 0.0
          %580 = vmatprep.subr.mxu0 0.0
          %581 = vmatpush1.xpose.msra.mxu0 0.0
          %582 = vmatprep.subr.mxu0 0.0
          %583 = vmatpush1.xpose.msra.mxu0 0.0
          %584 = vmatprep.subr.mxu0 0.0
          %585 = vmatpush1.xpose.msra.mxu0 0.0
          %586 = vmatprep.subr.mxu0 0.0
          %587 = vmatpush1.xpose.msra.mxu0 0.0
          %588 = vmatprep.subr.mxu0 0.0
          %589 = vmatpush1.xpose.msra.mxu0 0.0
          %590 = vmatprep.subr.mxu0 0.0
          %591 = vmatpush1.xpose.msra.mxu0 0.0
          %592 = vmatprep.subr.mxu0 0.0
          %593 = vmatpush1.xpose.msra.mxu0 0.0
          %594 = vmatprep.subr.mxu0 0.0
          %595 = vmatpush1.xpose.msra.mxu0 0.0
          %596 = vmatprep.subr.mxu0 0.0
          %597 = vmatpush1.xpose.msra.mxu0 0.0
          %598 = vmatprep.subr.mxu0 0.0
          %599 = vmatpush1.xpose.msra.mxu0 0.0
          %600 = vmatprep.subr.mxu0 0.0
          %601 = vmatpush1.xpose.msra.mxu0 0.0
          %602 = vmatprep.subr.mxu0 0.0
          %603 = vmatpush1.xpose.msra.mxu0 0.0
          %604 = vmatprep.subr.mxu0 0.0
          %605 = vmatpush1.xpose.msra.mxu0 0.0
          %606 = vmatprep.subr.mxu0 0.0
          %607 = vmatpush1.xpose.msra.mxu0 0.0
          %608 = vmatprep.subr.mxu0 0.0
          %609 = vmatpush1.xpose.msra.mxu0 0.0
          %610 = vmatprep.subr.mxu0 0.0
          %611 = vmatpush1.xpose.msra.mxu0 0.0
          %612 = vmatprep.subr.mxu0 0.0
          %613 = vmatpush1.xpose.msra.mxu0 0.0
          %614 = vmatprep.subr.mxu0 0.0
          %615 = vmatpush1.xpose.msra.mxu0 0.0
          %616 = vmatprep.subr.mxu0 0.0
          %617 = vmatpush1.xpose.msra.mxu0 0.0
          %618 = vmatprep.subr.mxu0 0.0
          %619 = vmatpush1.xpose.msra.mxu0 0.0
          %620 = vmatprep.subr.mxu0 0.0
          %621 = vmatpush1.xpose.msra.mxu0 0.0
          %622 = vmatprep.subr.mxu0 0.0
          %623 = vmatpush1.xpose.msra.mxu0 0.0
          %624 = vmatprep.subr.mxu0 0.0
          %625 = vmatpush1.xpose.msra.mxu0 0.0
          %626 = vmatprep.subr.mxu0 0.0
          %627 = vmatpush1.xpose.msra.mxu0 0.0
          %628 = vmatprep.subr.mxu0 0.0
          %629 = vmatpush1.xpose.msra.mxu0 0.0
          %630 = vmatprep.subr.mxu0 0.0
          %631 = vmatpush1.xpose.msra.mxu0 0.0
          %632 = vmatprep.mubr.f32.mxu0 %v559
          %633 = vmatmul.mubr.f32.gmra.mrb[0].mxu0 %v558
          %v634 = vpop.f32.mrb[0].mxu0
          %v635 = vadd.f32 0.0, %v634
          %v636 = vpop.f32.mrb[0].mxu0
          %637 = vmatprep.mubr.f32.mxu0 %v561
          %638 = vmatmul.mubr.f32.gmra.mrb[0].mxu0 %v560
          %v639 = vpop.f32.mrb[0].mxu0
          %v640 = vadd.f32 0.0, %v639
          %v641 = vpop.f32.mrb[0].mxu0
          %642 = vdwg.mxu0
          %v643 = vadd.f32 %v291, %v635
          %v644 = vadd.f32 %v292, %v640
          %v645 = vadd.f32 %v373, %v374
          %646 = vadd.xlane.f32.xlu0 %v645
          %v647 = vpop.xlane.xlu0 %646
          %v648 = vadd.f32 %v375, %v376
          %649 = vadd.xlane.f32.xlu0 %v648
          %v650 = vpop.xlane.xlu0 %649
          %v651 = vadd.f32 %v293, %v647
          %v652 = vadd.f32 %v294, %v650
        $region45: #{tpu_custom_call.1} parent=27 // loop_footer
          %s290 = sadd.s32 1, %s286
        $region46: #{tpu_custom_call.1} parent=27 // loop_footer_branch
          %285 = sbr.rel target = $region42
        $region47: #{tpu_custom_call.1} parent=27 // loop_exit
          _
        %vm653 = vcmask 130048
        %654 = vst.msk [vmem:[%s249] sm:$0xff] %vm653, %v291
        %655 = vst.msk [vmem:[%s249 + $0x8] sm:$0xff] %vm653, %v292
        %vm656 = vcmask 7168
        %657 = vst.msk [vmem:[%s263] sm:$0xff] %vm656, %v293
        %658 = vst.msk [vmem:[%s263 + $0x8] sm:$0xff] %vm656, %v294
        %659 = vst.msk [vmem:[#allocation2] sm:$0xff] %vm656, %v295
        %660 = vst.msk [vmem:[#allocation2 + $0x8] sm:$0xff] %vm656, %v296
        %s661 = sand.u32 %s100, 1
        %s662 = scalar_lea.sflag [#allocation5], %s661
        %s663 = sand.u32 %s100, 1
        %s664 = smul.addr %s663, 16
        %s665 = scalar_lea.vmem [#allocation8], %s664
        %p666 = scmp.lt.s32.totalorder %s28, 1
        %s667 = scalar_select %p666, %s28, 1
        %s668 = smul.addr %s667, 2
        %s669 = smul.addr %s668, 8
        %s670 = scalar_lea.vmem %s3, %s669
        // Predicated region
        $region48: #{tpu_custom_call.1} parent=27 // pred_check
          %p671 = pneg %p110
        $region49: #{tpu_custom_call.1} parent=27 // pred_check_branch
          %673 = sbr.rel (%p671) target = $region51
        $region50: #{tpu_custom_call.1} parent=27 // pred_region
          %s675 = ssub.s32 256, 256
          %676 = vsyncadd %s662, %s675
          %s677 = smul.addr %s28, 2
          %s678 = smul.addr %s677, 128
          %s679 = scalar_lea.hbm %s2, %s678
          %s680 = sshll.u32 %s665, 4
          %s681 = int_to_ptr.vmem [resolvable:$true] %s680
          %686 = dma.vmem_to_hbm [thread:$0]  %s681, 256, %s679, %s662, 128, 128, 8
        $region51: #{tpu_custom_call.1} parent=27 // pred_fallthru
          _
        // Predicated region
        $region52: #{tpu_custom_call.1} parent=27 // pred_check
          %p687 = pneg %p136
        $region53: #{tpu_custom_call.1} parent=27 // pred_check_branch
          %689 = sbr.rel (%p687) target = $region55
        $region54: #{tpu_custom_call.1} parent=27 // pred_region
          _
        $region55: #{tpu_custom_call.1} parent=27 // pred_fallthru
          _
      $region28: #{tpu_custom_call.1} parent=5 // pred_fallthru
        _
      %p690 = scmp.le.s32.totalorder 2, %s19
      // Predicated region
      $region56: #{tpu_custom_call.1} parent=5 // pred_check
        %p691 = pneg %p690
      $region57: #{tpu_custom_call.1} parent=5 // pred_check_branch
        %693 = sbr.rel (%p691) target = $region59
      $region58: #{tpu_custom_call.1} parent=5 // pred_region
        %s694 = ssub.s32 %s19, 2
        // Predicated region
        $region60: #{tpu_custom_call.1} parent=58 // pred_check
          %p695 = pneg %p116
        $region61: #{tpu_custom_call.1} parent=58 // pred_check_branch
          %697 = sbr.rel (%p695) target = $region63
        $region62: #{tpu_custom_call.1} parent=58 // pred_region
          %s698 = sand.u32 %s101, 1
          %s699 = scalar_lea.sflag [#allocation5], %s698
          %s700 = sand.u32 %s101, 1
          %s701 = smul.addr %s700, 16
          %s702 = scalar_lea.vmem [#allocation8], %s701
          %703 = dma.done %s699, 256
        $region63: #{tpu_custom_call.1} parent=58 // pred_fallthru
          _
        // Predicated region
        $region64: #{tpu_custom_call.1} parent=58 // pred_check
          %p704 = pneg %p142
        $region65: #{tpu_custom_call.1} parent=58 // pred_check_branch
          %706 = sbr.rel (%p704) target = $region67
        $region66: #{tpu_custom_call.1} parent=58 // pred_region
          %p707 = scmp.lt.s32.totalorder %s30, 1
          %s708 = scalar_select %p707, %s30, 1
          %s709 = smul.addr %s708, 2
          %s710 = smul.addr %s709, 8
          %s711 = scalar_lea.vmem %s3, %s710
        $region67: #{tpu_custom_call.1} parent=58 // pred_fallthru
          _
      $region59: #{tpu_custom_call.1} parent=5 // pred_fallthru
        _
    $region6: #{tpu_custom_call.1} parent=1 // loop_footer
      %s23 = sadd.s32 1, %s19
    $region7: #{tpu_custom_call.1} parent=1 // loop_footer_branch
      %18 = sbr.rel target = $region3
    $region8: #{tpu_custom_call.1} parent=1 // loop_exit
      _
    %712 = vsyncpa [#allocation4], 1
    %s713 = scalar_lea.sflag [#allocation4], 1
    %714 = vsyncpa %s713, 1
    %715 = vsyncpa [#allocation7], 1
    %s716 = scalar_lea.sflag [#allocation7], 1
    %717 = vsyncpa %s716, 1
    %718 = vsyncpa [#allocation5], 1
    %s719 = scalar_lea.sflag [#allocation5], 1
    %720 = vsyncpa %s719, 1

</llo_original>
